<compile_context>
chip_gen: v7x
topology: tpu7x:2x2x1
jax: 0.10.0
libtpu: 0.0.40
codegen_flags: <defaults>
</compile_context>

<pallas_src>
import functools

import jax
import jax.numpy as jnp
from jax.experimental import pallas as pl
from jax.experimental.pallas import tpu as pltpu


def _bootstrap_loss_kernel(logits_ref, out_ref, *, beta, label_smoothing,
                           total_rows, tile_b):
    i = pl.program_id(0)

    x = logits_ref[...].astype(jnp.float32)                    # [TB, C]
    TB, C = x.shape

    # Ones column used to push class-axis reductions through the MXU
    # (vex/MXU slots are otherwise idle; VALU is the saturated unit here).
    ones_col = jnp.ones((C, 1), dtype=jnp.float32)

    # Numerically stable softmax pieces (class axis = last axis = lanes).
    row_max = jnp.max(x, axis=1, keepdims=True)                 # [TB, 1]
    shifted = x - row_max                                       # [TB, C]
    exp_shifted = jnp.exp(shifted)                              # [TB, C] (EUP)

    # Class-axis row sums on the MXU: x @ ones_col.
    denom = jnp.dot(exp_shifted, ones_col,
                    preferred_element_type=jnp.float32)         # [TB, 1]
    sum_es_s = jnp.dot(exp_shifted * shifted, ones_col,
                       preferred_element_type=jnp.float32)      # [TB, 1]
    log_denom = jnp.log(denom)                                  # [TB, 1]

    # (1 - beta) term: sum_c softmax * log_softmax (probs never materialized).
    probs_term = sum_es_s / denom - log_denom                   # exact divide

    # beta term, *without* the target-logit contribution (that piece is linear
    # in logits[b, tgt] and is added back in the JAX wrapper):
    #   label_term = label_base + (conf - off) * logits[b, tgt]
    if label_smoothing > 0.0:
        confidence = 1.0 - label_smoothing
        off = label_smoothing / (C - 1)
        sum_s = jnp.dot(shifted, ones_col,
                        preferred_element_type=jnp.float32)     # [TB, 1]
        label_base = (off * (sum_s - C * log_denom)
                      - (confidence - off) * (row_max + log_denom))
    else:
        label_base = -(row_max + log_denom)

    loss_base = -(beta * label_base + (1.0 - beta) * probs_term)  # [TB, 1]

    # Discard rows past the true batch size (partial final tile).  Keep this a
    # true select so NaN/Inf in out-of-bounds garbage rows cannot leak.
    row_ids = jax.lax.broadcasted_iota(jnp.int32, (TB, 1), 0) + i * tile_b
    loss_base = jnp.where(row_ids < total_rows, loss_base, 0.0)

    out_ref[0, 0] = jnp.sum(loss_base)                          # per-tile partial (SMEM)


def _default_target_block_bytes():
    """Per-generation logits-tile budget in bytes."""
    try:
        kind = jax.devices()[0].device_kind.lower()
    except Exception:
        kind = ""
    if "v7" in kind or "7x" in kind:
        return 3 << 20      # v7x: ~3.2 TB/s HBM -> bigger tiles to hide step overhead
    return 2 << 20          # v5e / v6e


def _choose_tile_b(B, C, itemsize, target_bytes):
    tile = target_bytes // max(1, C * itemsize)
    tile = max(8, (tile // 8) * 8)
    if tile >= B:
        return B            # full batch as one block (legal even if B % 8 != 0)
    return int(tile)


def _vmem_limit_bytes(tile_b, C, in_itemsize):
    tile_elems = tile_b * C
    est = 2 * tile_elems * in_itemsize   # double-buffered logits input blocks
    est += 5 * tile_elems * 4            # f32 cast / shifted / exp / product + slack
    est += 2 << 20                       # constants, partials, misc
    # Keep headroom under v7x's 64 MiB physical VMEM; raise above the 16 MiB
    # v5e scoped default.
    return int(min(48 << 20, max(16 << 20, est)))


def bootstrapping_loss(logits, targets, *, beta=0.95, label_smoothing=0.0,
                       tile_b=None, target_block_bytes=None):
    """Pallas implementation of BootstrappingLoss.forward.

    logits: [B, C] float array (f32 or bf16); targets: [B] int array.
    Returns a scalar f32 loss (mean over the batch).
    """
    assert 0.0 <= label_smoothing < 1.0
    B, C = logits.shape
    itemsize = jnp.dtype(logits.dtype).itemsize

    if target_block_bytes is None:
        target_block_bytes = _default_target_block_bytes()
    if tile_b is None:
        tile_b = _choose_tile_b(B, C, itemsize, target_block_bytes)
    num_tiles = pl.cdiv(B, tile_b)

    kernel = functools.partial(
        _bootstrap_loss_kernel,
        beta=float(beta),
        label_smoothing=float(label_smoothing),
        total_rows=B,
        tile_b=tile_b,
    )

    partials = pl.pallas_call(
        kernel,
        out_shape=jax.ShapeDtypeStruct((num_tiles, 1), jnp.float32),
        grid=(num_tiles,),
        in_specs=[
            pl.BlockSpec((tile_b, C), lambda i: (i, 0)),        # logits tile
        ],
        out_specs=pl.BlockSpec((1, 1), lambda i: (i, 0),
                               memory_space=pltpu.MemorySpace.SMEM),
        compiler_params=pltpu.CompilerParams(
            dimension_semantics=("parallel",),                  # v7x: both TCs
            vmem_limit_bytes=_vmem_limit_bytes(tile_b, C, itemsize),
        ),
    )(logits)

    # Target-logit contribution: enters the total loss linearly with a constant
    # coefficient, so gather + sum it here (B elements) instead of doing one-hot
    # extraction in the kernel.  Fall back to in-kernel one-hot + MXU reduce if
    # this gather ever lowers to a full re-read of `logits` from HBM.
    tgt = targets.astype(jnp.int32)
    flat_idx = jnp.arange(B, dtype=jnp.int32) * C + tgt
    tgt_logit_sum = jnp.sum(
        jnp.take(logits.reshape(-1), flat_idx, axis=0).astype(jnp.float32))

    if label_smoothing > 0.0:
        confidence = 1.0 - label_smoothing
        off = label_smoothing / (C - 1)
    else:
        confidence, off = 1.0, 0.0
    w_tgt = beta * (confidence - off)

    return (jnp.sum(partials) - w_tgt * tgt_logit_sum) / B


def _reference_loss(logits, targets, beta=0.95, label_smoothing=0.0):
    # Pure-JAX reference mirroring the PyTorch forward.
    logits = logits.astype(jnp.float32)
    C = logits.shape[1]
    log_probs = jax.nn.log_softmax(logits, axis=1)
    probs = jax.nn.softmax(logits, axis=1)
    onehot = jax.nn.one_hot(targets, C, dtype=jnp.float32)
    if label_smoothing > 0.0:
        true_labels = onehot * (1.0 - label_smoothing) + (1 - onehot) * (
            label_smoothing / (C - 1)
        )
    else:
        true_labels = onehot
    blended = beta * true_labels + (1.0 - beta) * probs
    return jnp.mean(-jnp.sum(blended * log_probs, axis=1))


if __name__ == "__main__":
    key = jax.random.PRNGKey(0)
    k1, k2, k3, k4 = jax.random.split(key, 4)

    # Small case: batch=8, classes=32, single tile.
    B, C = 8, 32
    logits = jax.random.normal(k1, (B, C), dtype=jnp.float32)
    targets = jax.random.randint(k2, (B,), 0, C, dtype=jnp.int32)

    loss = jax.block_until_ready(
        bootstrapping_loss(logits, targets, beta=0.95, label_smoothing=0.0))
    ref = _reference_loss(logits, targets, beta=0.95, label_smoothing=0.0)
    assert jnp.allclose(loss, ref, atol=1e-4, rtol=1e-4), (loss, ref)

    loss_s = jax.block_until_ready(
        bootstrapping_loss(logits, targets, beta=0.95, label_smoothing=0.1))
    ref_s = _reference_loss(logits, targets, beta=0.95, label_smoothing=0.1)
    assert jnp.allclose(loss_s, ref_s, atol=1e-4, rtol=1e-4), (loss_s, ref_s)

    # Multi-tile case with a partial last tile (B=20, tile_b=8 -> 3 tiles),
    # exercising batch tiling + OOB-row masking.
    B2, C2 = 20, 32
    logits2 = jax.random.normal(k3, (B2, C2), dtype=jnp.float32)
    targets2 = jax.random.randint(k4, (B2,), 0, C2, dtype=jnp.int32)
    loss2 = jax.block_until_ready(
        bootstrapping_loss(logits2, targets2, beta=0.95, label_smoothing=0.1,
                           tile_b=8))
    ref2 = _reference_loss(logits2, targets2, beta=0.95, label_smoothing=0.1)
    assert jnp.allclose(loss2, ref2, atol=1e-4, rtol=1e-4), (loss2, ref2)

    # bf16 logits stay bf16 on the HBM wire; the f32 cast happens per tile.
    logits_bf = logits2.astype(jnp.bfloat16)
    loss_bf = jax.block_until_ready(
        bootstrapping_loss(logits_bf, targets2, beta=0.95, label_smoothing=0.0,
                           tile_b=8))
    ref_bf = _reference_loss(logits_bf, targets2, beta=0.95, label_smoothing=0.0)
    assert jnp.allclose(loss_bf, ref_bf, atol=1e-3, rtol=1e-3), (loss_bf, ref_bf)

    print("KERNEL_OK")
</pallas_src>

<mosaic_0001>
module attributes {stable_mosaic.version = 11 : i64} {
  func.func @_bootstrap_loss_kernel(%arg0: i32, %arg1: memref<8x32xf32, #tpu.memory_space<vmem>>, %arg2: memref<1x1xf32, #tpu.memory_space<smem>>) attributes {dimension_semantics = [#tpu.dimension_semantics<parallel>], iteration_bounds = array<i64: 1>, scalar_prefetch = 0 : i64, scratch_operands = 0 : i64, tpu.core_type = #tpu.core_type<tc>, window_params = [{transform_indices = @transform_0, window_bounds = array<i64: 8, 32>}, {transform_indices = @transform_1, window_bounds = array<i64: 1, 1>}]} {
    %c0 = arith.constant 0 : index
    %c0_0 = arith.constant 0 : index
    %0 = vector.load %arg1[%c0, %c0_0] : memref<8x32xf32, #tpu.memory_space<vmem>>, vector<8x32xf32>
    %cst = arith.constant 1.000000e+00 : f32
    %1 = vector.broadcast %cst : f32 to vector<32x1xf32>
    %cst_1 = arith.constant dense<0xFF800000> : vector<8xf32>
    %2 = vector.multi_reduction <maximumf>, %0, %cst_1 [1] : vector<8x32xf32> to vector<8xf32>
    %3 = vector.shape_cast %2 : vector<8xf32> to vector<8x1xf32>
    %4 = vector.broadcast %3 : vector<8x1xf32> to vector<8x32xf32>
    %5 = arith.subf %0, %4 : vector<8x32xf32>
    %6 = math.exp %5 : vector<8x32xf32>
    %cst_2 = arith.constant dense<0.000000e+00> : vector<8x1xf32>
    %7 = tpu.matmul %6, %1, %cst_2 {dimension_numbers = #tpu.dot_dimension_numbers<[1], [0], [0], [1], [0, 0, 1, 1], [], []>} : vector<8x32xf32>, vector<32x1xf32>, vector<8x1xf32> -> vector<8x1xf32>
    %8 = arith.mulf %6, %5 : vector<8x32xf32>
    %cst_3 = arith.constant dense<0.000000e+00> : vector<8x1xf32>
    %9 = tpu.matmul %8, %1, %cst_3 {dimension_numbers = #tpu.dot_dimension_numbers<[1], [0], [0], [1], [0, 0, 1, 1], [], []>} : vector<8x32xf32>, vector<32x1xf32>, vector<8x1xf32> -> vector<8x1xf32>
    %10 = math.log %7 : vector<8x1xf32>
    %11 = arith.divf %9, %7 : vector<8x1xf32>
    %12 = arith.subf %11, %10 : vector<8x1xf32>
    %13 = arith.addf %3, %10 : vector<8x1xf32>
    %cst_4 = arith.constant 0.000000e+00 : f32
    %14 = vector.broadcast %cst_4 : f32 to vector<8x1xf32>
    %15 = arith.subf %14, %13 : vector<8x1xf32>
    %cst_5 = arith.constant 0.949999988 : f32
    %16 = vector.broadcast %cst_5 : f32 to vector<8x1xf32>
    %17 = arith.mulf %16, %15 : vector<8x1xf32>
    %cst_6 = arith.constant 5.000000e-02 : f32
    %18 = vector.broadcast %cst_6 : f32 to vector<8x1xf32>
    %19 = arith.mulf %18, %12 : vector<8x1xf32>
    %20 = arith.addf %17, %19 : vector<8x1xf32>
    %cst_7 = arith.constant 0.000000e+00 : f32
    %21 = vector.broadcast %cst_7 : f32 to vector<8x1xf32>
    %22 = arith.subf %21, %20 : vector<8x1xf32>
    %23 = tpu.iota {dimensions = array<i32: 0>} : vector<8x1xi32>
    %c8_i32 = arith.constant 8 : i32
    %24 = arith.muli %arg0, %c8_i32 : i32
    %25 = vector.broadcast %24 : i32 to vector<8x1xi32>
    %26 = arith.addi %23, %25 : vector<8x1xi32>
    %c8_i32_8 = arith.constant 8 : i32
    %27 = vector.broadcast %c8_i32_8 : i32 to vector<8x1xi32>
    %28 = arith.cmpi slt, %26, %27 : vector<8x1xi32>
    %cst_9 = arith.constant 0.000000e+00 : f32
    %29 = vector.broadcast %cst_9 : f32 to vector<8x1xf32>
    %30 = arith.select %28, %22, %29 : vector<8x1xi1>, vector<8x1xf32>
    %31 = vector.shape_cast %30 : vector<8x1xf32> to vector<1x8x1xf32>
    %cst_10 = arith.constant dense<0.000000e+00> : vector<1xf32>
    %32 = vector.multi_reduction <add>, %31, %cst_10 [1, 2] : vector<1x8x1xf32> to vector<1xf32>
    %33 = vector.shape_cast %32 : vector<1xf32> to vector<1x1x1xf32>
    %34 = vector.extract %33[0, 0, 0] : f32 from vector<1x1x1xf32>
    %c0_11 = arith.constant 0 : index
    %c0_12 = arith.constant 0 : index
    %35 = memref.load %arg2[%c0_11, %c0_12] : memref<1x1xf32, #tpu.memory_space<smem>>
    memref.store %34, %arg2[%c0_11, %c0_12] : memref<1x1xf32, #tpu.memory_space<smem>>
    return
  }
  func.func @transform_0(%arg0: i32) -> (i32, i32) {
    %c0_i32 = arith.constant 0 : i32
    %c0_i32_0 = arith.constant 0 : i32
    return %arg0, %c0_i32 : i32, i32
  }
  func.func @transform_1(%arg0: i32) -> (i32, i32) {
    %c0_i32 = arith.constant 0 : i32
    %c0_i32_0 = arith.constant 0 : i32
    return %arg0, %c0_i32 : i32, i32
  }
}

</mosaic_0001>

<llo_original>
// kernel: tpu_custom_call.1
$region0: #{tpu_custom_call.1}
  #allocation0 [shape = 'u32[]', space=smem, size = 0x4, offset = 0x4, fixed_abs, tag = 'smem constant byte address 0x4 - core index']
  #allocation1 [shape = 'u32[144,128]{1,0:T(1,128)}', space=vmem, size = 0x12000, scoped, tag = 'internal scratch']
  %s0 = inlined_call_operand.hbm [shape: f32[8,32], index: 0, kind: input, shape index: {}]
  %s1 = inlined_call_operand.hbm [shape: f32[1,1], index: 1, kind: output, shape index: {}]
  %s2 = sld [smem:[#allocation0]]
  $region18: #{tpu_custom_call.1} parent=0
    _
  %s4 = ssub.s32 1, %s2
  %s5 = scalar_select 0, %s4, %s2
  $region1: #{tpu_custom_call.1} parent=0
    #allocation2 [shape = 'u8[4096]{0}', space=vmem, size = 0x1000, scoped, tag = 'input window, operand 0, single buffered']
    #allocation3 [shape = 's32[1]{0}', space=sflag, size = 0x4, scoped, tag = 'scoped memory for tpu_custom_call.1']
    #allocation4 [shape = 's32[1]{0}', space=sflag, size = 0x4, scoped, tag = 'scoped memory for tpu_custom_call.1']
    #allocation5 [shape = 'u8[512]{0}', space=smem, size = 0x200, scoped, tag = 'output window, operand 0, single buffered']
    %6 = vsyncpa [#allocation3], 0
    %7 = vsyncpa [#allocation4], 0
    // Predicated region
    $region2: #{tpu_custom_call.1} parent=1 // pred_check
      _
    $region3: #{tpu_custom_call.1} parent=1 // pred_check_branch
      %9 = sbr.rel (0) target = $region5
    $region4: #{tpu_custom_call.1} parent=1 // pred_region
      %s11 = ssub.s32 128, 128
      %12 = vsyncadd [#allocation3], %s11
      %s14 = sshll.u32 [#allocation2], 4
      %s15 = int_to_ptr.vmem [resolvable:$true] %s14
      %17 = dma.hbm_to_vmem [thread:$0]  %s0, 128, %s15, [#allocation3]
    $region5: #{tpu_custom_call.1} parent=1 // pred_fallthru
      _
    // Predicated region
    $region6: #{tpu_custom_call.1} parent=1 // pred_check
      _
    $region7: #{tpu_custom_call.1} parent=1 // pred_check_branch
      %19 = sbr.rel (0) target = $region9
    $region8: #{tpu_custom_call.1} parent=1 // pred_region
      %20 = dma.done [#allocation3], 128
    $region9: #{tpu_custom_call.1} parent=1 // pred_fallthru
      _
    %v21 = vld [vmem:[#allocation2] sm:$0xff]
    %vm22 = vcmask 261120
    %v23 = vsel %vm22, %v21, -inf
    %24 = vmax.xlane.f32.xlu0 %v23
    %v25 = vpop.xlane.xlu0 %24
    %v26 = vsub.f32 %v21, %v25
    %v27 = vmul.f32 %v26, 1.442695
    %v28 = vpow.pop %v27
    %v30 = vsel %vm22, %v28, 0
    %32 = vmatprep.subr.mxu0 0.0
    %33 = vmatpush1.msra.mxu0 1.0
    %34 = vmatprep.subr.mxu0 0.0
    %35 = vmatpush1.msra.mxu0 1.0
    %36 = vmatprep.subr.mxu0 0.0
    %37 = vmatpush1.msra.mxu0 1.0
    %38 = vmatprep.subr.mxu0 0.0
    %39 = vmatpush1.msra.mxu0 1.0
    %40 = vmatprep.subr.mxu0 0.0
    %41 = vmatpush1.msra.mxu0 0.0
    %42 = vmatprep.subr.mxu0 0.0
    %43 = vmatpush1.msra.mxu0 0.0
    %44 = vmatprep.subr.mxu0 0.0
    %45 = vmatpush1.msra.mxu0 0.0
    %46 = vmatprep.subr.mxu0 0.0
    %47 = vmatpush1.msra.mxu0 0.0
    %48 = vmatprep.subr.mxu0 0.0
    %49 = vmatpush1.msra.mxu0 0.0
    %50 = vmatprep.subr.mxu0 0.0
    %51 = vmatpush1.msra.mxu0 0.0
    %52 = vmatprep.subr.mxu0 0.0
    %53 = vmatpush1.msra.mxu0 0.0
    %54 = vmatprep.subr.mxu0 0.0
    %55 = vmatpush1.msra.mxu0 0.0
    %56 = vmatprep.subr.mxu0 0.0
    %57 = vmatpush1.msra.mxu0 0.0
    %58 = vmatprep.subr.mxu0 0.0
    %59 = vmatpush1.msra.mxu0 0.0
    %60 = vmatprep.subr.mxu0 0.0
    %61 = vmatpush1.msra.mxu0 0.0
    %62 = vmatprep.subr.mxu0 0.0
    %63 = vmatpush1.msra.mxu0 0.0
    %64 = vmatprep.subr.mxu0 0.0
    %65 = vmatpush1.msra.mxu0 0.0
    %66 = vmatprep.subr.mxu0 0.0
    %67 = vmatpush1.msra.mxu0 0.0
    %68 = vmatprep.subr.mxu0 0.0
    %69 = vmatpush1.msra.mxu0 0.0
    %70 = vmatprep.subr.mxu0 0.0
    %71 = vmatpush1.msra.mxu0 0.0
    %72 = vmatprep.subr.mxu0 0.0
    %73 = vmatpush1.msra.mxu0 0.0
    %74 = vmatprep.subr.mxu0 0.0
    %75 = vmatpush1.msra.mxu0 0.0
    %76 = vmatprep.subr.mxu0 0.0
    %77 = vmatpush1.msra.mxu0 0.0
    %78 = vmatprep.subr.mxu0 0.0
    %79 = vmatpush1.msra.mxu0 0.0
    %80 = vmatprep.subr.mxu0 0.0
    %81 = vmatpush1.msra.mxu0 0.0
    %82 = vmatprep.subr.mxu0 0.0
    %83 = vmatpush1.msra.mxu0 0.0
    %84 = vmatprep.subr.mxu0 0.0
    %85 = vmatpush1.msra.mxu0 0.0
    %86 = vmatprep.subr.mxu0 0.0
    %87 = vmatpush1.msra.mxu0 0.0
    %88 = vmatprep.subr.mxu0 0.0
    %89 = vmatpush1.msra.mxu0 0.0
    %90 = vmatprep.subr.mxu0 0.0
    %91 = vmatpush1.msra.mxu0 0.0
    %92 = vmatprep.subr.mxu0 0.0
    %93 = vmatpush1.msra.mxu0 0.0
    %94 = vmatprep.subr.mxu0 0.0
    %95 = vmatpush1.msra.mxu0 0.0
    %96 = vmatprep.mubr.f32.mxu0 0.0
    %97 = vmatmul.mubr.f32.gmra.mrb[0].mxu0 %v30
    %v98 = vpop.f32.mrb[0].mxu0
    %v99 = vadd.f32 0.0, %v98
    %v100 = vpop.f32.mrb[0].mxu0
    %101 = vdwg.mxu0
    %v102 = vmul.f32 %v28, %v26
    %v104 = vsel %vm22, %v102, 0
    %106 = vmatprep.subr.mxu0 0.0
    %107 = vmatpush1.msra.mxu0 1.0
    %108 = vmatprep.subr.mxu0 0.0
    %109 = vmatpush1.msra.mxu0 1.0
    %110 = vmatprep.subr.mxu0 0.0
    %111 = vmatpush1.msra.mxu0 1.0
    %112 = vmatprep.subr.mxu0 0.0
    %113 = vmatpush1.msra.mxu0 1.0
    %114 = vmatprep.subr.mxu0 0.0
    %115 = vmatpush1.msra.mxu0 0.0
    %116 = vmatprep.subr.mxu0 0.0
    %117 = vmatpush1.msra.mxu0 0.0
    %118 = vmatprep.subr.mxu0 0.0
    %119 = vmatpush1.msra.mxu0 0.0
    %120 = vmatprep.subr.mxu0 0.0
    %121 = vmatpush1.msra.mxu0 0.0
    %122 = vmatprep.subr.mxu0 0.0
    %123 = vmatpush1.msra.mxu0 0.0
    %124 = vmatprep.subr.mxu0 0.0
    %125 = vmatpush1.msra.mxu0 0.0
    %126 = vmatprep.subr.mxu0 0.0
    %127 = vmatpush1.msra.mxu0 0.0
    %128 = vmatprep.subr.mxu0 0.0
    %129 = vmatpush1.msra.mxu0 0.0
    %130 = vmatprep.subr.mxu0 0.0
    %131 = vmatpush1.msra.mxu0 0.0
    %132 = vmatprep.subr.mxu0 0.0
    %133 = vmatpush1.msra.mxu0 0.0
    %134 = vmatprep.subr.mxu0 0.0
    %135 = vmatpush1.msra.mxu0 0.0
    %136 = vmatprep.subr.mxu0 0.0
    %137 = vmatpush1.msra.mxu0 0.0
    %138 = vmatprep.subr.mxu0 0.0
    %139 = vmatpush1.msra.mxu0 0.0
    %140 = vmatprep.subr.mxu0 0.0
    %141 = vmatpush1.msra.mxu0 0.0
    %142 = vmatprep.subr.mxu0 0.0
    %143 = vmatpush1.msra.mxu0 0.0
    %144 = vmatprep.subr.mxu0 0.0
    %145 = vmatpush1.msra.mxu0 0.0
    %146 = vmatprep.subr.mxu0 0.0
    %147 = vmatpush1.msra.mxu0 0.0
    %148 = vmatprep.subr.mxu0 0.0
    %149 = vmatpush1.msra.mxu0 0.0
    %150 = vmatprep.subr.mxu0 0.0
    %151 = vmatpush1.msra.mxu0 0.0
    %152 = vmatprep.subr.mxu0 0.0
    %153 = vmatpush1.msra.mxu0 0.0
    %154 = vmatprep.subr.mxu0 0.0
    %155 = vmatpush1.msra.mxu0 0.0
    %156 = vmatprep.subr.mxu0 0.0
    %157 = vmatpush1.msra.mxu0 0.0
    %158 = vmatprep.subr.mxu0 0.0
    %159 = vmatpush1.msra.mxu0 0.0
    %160 = vmatprep.subr.mxu0 0.0
    %161 = vmatpush1.msra.mxu0 0.0
    %162 = vmatprep.subr.mxu0 0.0
    %163 = vmatpush1.msra.mxu0 0.0
    %164 = vmatprep.subr.mxu0 0.0
    %165 = vmatpush1.msra.mxu0 0.0
    %166 = vmatprep.subr.mxu0 0.0
    %167 = vmatpush1.msra.mxu0 0.0
    %168 = vmatprep.subr.mxu0 0.0
    %169 = vmatpush1.msra.mxu0 0.0
    %170 = vmatprep.mubr.f32.mxu0 0.0
    %171 = vmatmul.mubr.f32.gmra.mrb[0].mxu0 %v104
    %v172 = vpop.f32.mrb[0].mxu0
    %v173 = vadd.f32 0.0, %v172
    %v174 = vpop.f32.mrb[0].mxu0
    %175 = vdwg.mxu0
    %v176 = vlog2.pop %v99
    %v177 = vmul.f32 %v176, 0.6931472
    %v178 = vrcp.pop %v99
    %v179 = vmul.f32 %v173, %v178
    %v180 = vsub.f32 %v179, %v177
    %v181 = vadd.f32 %v25, %v177
    %v182 = vsub.f32 0.0, %v181
    %v183 = vmul.f32 %v182, 0.95
    %v184 = vmul.f32 %v180, 0.05
    %v185 = vadd.f32 %v183, %v184
    %v186 = vsub.f32 0.0, %v185
    %v187 = vlaneseq
    %v188 = vshrl.u32 %v187, 7
    %s189 = smul.u32 0, 8
    %v190 = vstv %s189
    %v191 = vadd.s32 %v188, %v190
    %vm192 = vcmp.lt.s32.totalorder %v191, 8
    %v193 = vsel %vm192, %v186, 0.0
    %vm194 = vcmask 7168
    %v195 = vsel %vm194, %v193, 0.0
    %196 = vadd.xlane.f32.xlu0 %v195
    %v197 = vpop.xlane.xlu0 %196
    %v198 = vrot.slane %v197, 4
    %v199 = vadd.f32 %v197, %v198
    %v200 = vrot.slane %v199, 2
    %v201 = vadd.f32 %v199, %v200
    %v202 = vrot.slane %v201, 1
    %v203 = vadd.f32 %v201, %v202
    %s204 = vtos %v203
    %s205 = scalar_lea.smem [#allocation5], 0
    %206 = sst [smem:[%s205]] %s204
    // Predicated region
    $region10: #{tpu_custom_call.1} parent=1 // pred_check
      _
    $region11: #{tpu_custom_call.1} parent=1 // pred_check_branch
      %208 = sbr.rel (0) target = $region13
    $region12: #{tpu_custom_call.1} parent=1 // pred_region
      %s210 = ssub.s32 16, 16
      %211 = vsyncadd [#allocation4], %s210
      %214 = dma.smem_to_hbm [#allocation5], 16, %s1, [#allocation4]
    $region13: #{tpu_custom_call.1} parent=1 // pred_fallthru
      _
    // Predicated region
    $region14: #{tpu_custom_call.1} parent=1 // pred_check
      _
    $region15: #{tpu_custom_call.1} parent=1 // pred_check_branch
      %216 = sbr.rel (0) target = $region17
    $region16: #{tpu_custom_call.1} parent=1 // pred_region
      %217 = dma.done [#allocation4], 16
    $region17: #{tpu_custom_call.1} parent=1 // pred_fallthru
      _
    %218 = sfence
    %219 = vsyncpa [#allocation3], 1
    %220 = vsyncpa [#allocation4], 1

</llo_original>
